<compile_context>
chip_gen: v5e
topology: v5e:2x2
jax: 0.10.0
libtpu: 0.0.40
codegen_flags: <defaults>
</compile_context>

<pallas_src>
import functools
import math

import jax
import jax.numpy as jnp
from jax.experimental import pallas as pl
from jax.experimental.pallas import tpu as pltpu


# ---------------------------------------------------------------------------
# helpers
# ---------------------------------------------------------------------------

def _round_up(x, m):
    return (x + m - 1) // m * m


def _vmem_budget():
    """(per-step tile budget, physical VMEM) -- generation aware, conservative."""
    try:
        info = pltpu.get_tpu_info()
        phys = int(getattr(info, "vmem_capacity_bytes", 0)) or (64 << 20)
    except Exception:                       # no TPU info -> assume smallest (v7x, 64 MiB)
        phys = 64 << 20
    return min(24 << 20, phys // 3), phys


def _vmem_limit_bytes():
    _, phys = _vmem_budget()
    return int(max(32 << 20, min(phys * 3 // 4, 96 << 20)))


_BF16_LOW_FIRST = []


def _bf16_low_half_is_first():
    """Does XLA's u32 -> (bf16, bf16) bitcast put the low 16 bits at pair index 0?"""
    if not _BF16_LOW_FIRST:
        try:
            pair = jax.lax.bitcast_convert_type(
                jnp.array([0xBF803F80], dtype=jnp.uint32), jnp.bfloat16)
            v0 = float(pair.reshape(-1)[0])
            if v0 == 1.0:        # low half 0x3F80 == bf16(1.0) comes first
                _BF16_LOW_FIRST.append(True)
            elif v0 == -1.0:     # high half 0xBF80 == bf16(-1.0) comes first
                _BF16_LOW_FIRST.append(False)
            else:
                _BF16_LOW_FIRST.append(None)
        except Exception:
            _BF16_LOW_FIRST.append(None)
    return _BF16_LOW_FIRST[0]


# ---------------------------------------------------------------------------
# kernels
# ---------------------------------------------------------------------------

def _conv_bn_relu_kernel(x_ref, w_ref, scale_ref, shift_ref, o_ref, *, bn):
    # x_ref: (bn, Cin, tm), w_ref: (Cout, Cin), scale/shift: (Cout, 1) f32,
    # o_ref: (bn, Cout, tm) in the I/O dtype.  Pixels live on the lane axis.
    for b in range(bn):
        y = jnp.dot(w_ref[...], x_ref[b], preferred_element_type=jnp.float32)
        y = jnp.maximum(y * scale_ref[...] + shift_ref[...], 0.0)
        o_ref[b] = y.astype(o_ref.dtype)


def _conv_bn_relu_shuffle_kernel(x_ref, w_ref, scale_ref, shift_ref, o_ref, *,
                                 bn, th, w_cols, n_co, low_first):
    # Fused conv(1x1)+BN+ReLU+PixelShuffle(2), bf16 output packed as uint32 lanes.
    # Weight rows are pre-permuted into 4 groups g = 2*i + j (each of n_co channels):
    #   group g, row c  ==  original output channel 4*c + g.
    # o_ref: (bn, n_co, 2*th, W) uint32, each uint32 packs output columns (2w, 2w+1).
    for b in range(bn):
        y = jnp.dot(w_ref[...], x_ref[b], preferred_element_type=jnp.float32)
        y = jnp.maximum(y * scale_ref[...] + shift_ref[...], 0.0)
        # Round to bf16 values (still held in f32); the bf16 bit pattern is then the
        # high 16 bits of the f32 encoding and the low 16 bits are zero.
        y = y.astype(jnp.bfloat16).astype(jnp.float32)
        bits = pltpu.bitcast(y, jnp.uint32)              # (Cout, th*W)
        for i in range(2):                               # output row parity
            j0 = bits[(2 * i) * n_co:(2 * i + 1) * n_co, :]      # columns 2w
            j1 = bits[(2 * i + 1) * n_co:(2 * i + 2) * n_co, :]  # columns 2w + 1
            if low_first:
                packed = (j0 >> 16) | j1
            else:
                packed = (j1 >> 16) | j0
            for h in range(th):                          # scatter tile rows
                o_ref[b, :, 2 * h + i, :] = packed[:, h * w_cols:(h + 1) * w_cols]


# ---------------------------------------------------------------------------
# pallas_call wrappers
# ---------------------------------------------------------------------------

def _conv1x1_bn_relu(x_flat, w, scale, shift, *, tm, bn):
    n, cin, hw = x_flat.shape
    cout = w.shape[0]
    isz = x_flat.dtype.itemsize
    return pl.pallas_call(
        functools.partial(_conv_bn_relu_kernel, bn=bn),
        out_shape=jax.ShapeDtypeStruct((n, cout, hw), x_flat.dtype),
        grid_spec=pltpu.PrefetchScalarGridSpec(
            num_scalar_prefetch=0,
            grid=(n // bn, hw // tm),
            in_specs=[
                pl.BlockSpec((bn, cin, tm), lambda nb, m: (nb, 0, m)),
                pl.BlockSpec((cout, cin), lambda nb, m: (0, 0)),
                pl.BlockSpec((cout, 1), lambda nb, m: (0, 0)),
                pl.BlockSpec((cout, 1), lambda nb, m: (0, 0)),
            ],
            out_specs=pl.BlockSpec((bn, cout, tm), lambda nb, m: (nb, 0, m)),
        ),
        compiler_params=pltpu.CompilerParams(
            dimension_semantics=("parallel", "parallel"),
            vmem_limit_bytes=_vmem_limit_bytes()),
        cost_estimate=pl.CostEstimate(
            flops=2 * n * hw * cin * cout,
            transcendentals=0,
            bytes_accessed=isz * (n * cin * hw + cout * cin + n * cout * hw)),
    )(x_flat, w, scale, shift)


def _conv1x1_bn_relu_shuffle(x_flat, w, scale, shift, *,
                             height, width, th, bn, low_first):
    n, cin, hw = x_flat.shape
    cout = w.shape[0]
    n_co = cout // 4
    tm = th * width
    return pl.pallas_call(
        functools.partial(_conv_bn_relu_shuffle_kernel, bn=bn, th=th,
                          w_cols=width, n_co=n_co, low_first=low_first),
        out_shape=jax.ShapeDtypeStruct((n, n_co, 2 * height, width), jnp.uint32),
        grid_spec=pltpu.PrefetchScalarGridSpec(
            num_scalar_prefetch=0,
            grid=(n // bn, height // th),
            in_specs=[
                pl.BlockSpec((bn, cin, tm), lambda nb, m: (nb, 0, m)),
                pl.BlockSpec((cout, cin), lambda nb, m: (0, 0)),
                pl.BlockSpec((cout, 1), lambda nb, m: (0, 0)),
                pl.BlockSpec((cout, 1), lambda nb, m: (0, 0)),
            ],
            out_specs=pl.BlockSpec((bn, n_co, 2 * th, width),
                                   lambda nb, m: (nb, 0, m, 0)),
        ),
        compiler_params=pltpu.CompilerParams(
            dimension_semantics=("parallel", "parallel"),
            vmem_limit_bytes=_vmem_limit_bytes()),
        cost_estimate=pl.CostEstimate(
            flops=2 * n * hw * cin * cout,
            transcendentals=0,
            bytes_accessed=2 * (n * cin * hw + cout * cin)
                           + 4 * n * n_co * 2 * height * width),
    )(x_flat, w, scale, shift)


# ---------------------------------------------------------------------------
# tiling heuristics
# ---------------------------------------------------------------------------

def _pick_batch_tile(n, per_image_bytes, avail, n_pixel_tiles,
                     target=1 << 20, cap=8):
    """Merge images into one block until a grid step moves ~1 MiB (amortizes the
    ~0.35us per-step overhead), but keep >=2 grid steps so both v7x TCs get work."""
    bn = 1
    for cand in range(1, min(n, cap) + 1):
        if n % cand:
            continue
        if 2 * cand * per_image_bytes > avail:
            break
        bn = cand
        if cand * per_image_bytes >= target:
            break
    while bn > 1 and (n // bn) * n_pixel_tiles < 2:
        cand = bn - 1
        while cand > 1 and n % cand:
            cand -= 1
        bn = cand
    return bn


def _plan_flat(n, cin, cout, hw, in_bytes, out_bytes):
    """Tiling for the unfused kernel: flat lane-dense pixel tiles (multiples of 128)."""
    budget, _ = _vmem_budget()
    avail = max(budget - 2 * cout * cin * in_bytes - (64 << 10), 1 << 20)
    per_pixel = cin * in_bytes + cout * out_bytes
    tm = (avail // (2 * per_pixel)) // 128 * 128
    tm = max(128, min(tm, _round_up(hw, 128)))
    hw_pad = _round_up(hw, tm)
    bn = _pick_batch_tile(n, per_pixel * tm, avail, hw_pad // tm)
    return tm, hw_pad, bn


def _plan_fused(n, cin, cout, height, width, in_bytes=2):
    """Row tile (th) + batch tile for the fused bf16+PixelShuffle kernel, or (None, 1)
    if this shape is better served by the unfused path."""
    if width < 4 or not (width % 128 == 0 or 128 % width == 0):
        return None, 1
    # rows per tile must keep the input pixel tile a multiple of 128 lanes and the
    # output row block a multiple of 8 sublanes.
    unit = max(128 // math.gcd(width, 128), 4)
    n_co = cout // 4
    budget, _ = _vmem_budget()
    avail = max(budget - 2 * cout * cin * in_bytes - (64 << 10), 1 << 20)

    def tile_bytes(th):
        in_t = cin * th * width * in_bytes
        out_t = n_co * _round_up(2 * th, 8) * _round_up(width, 128) * 4
        return in_t + out_t

    th = None
    cand = unit
    while cand <= min(height, 64):          # 64 caps the unrolled store count
        if height % cand == 0 and 2 * tile_bytes(cand) <= avail:
            th = cand
        cand += unit
    if th is None:
        return None, 1
    bn = _pick_batch_tile(n, tile_bytes(th), avail, height // th)
    return th, bn


# ---------------------------------------------------------------------------
# module forward
# ---------------------------------------------------------------------------

def pixel_shuffle_nchw(x, r):
    # PyTorch PixelShuffle: out[n, c, h*r+i, w*r+j] = x[n, c*r*r + i*r + j, h, w]
    n, c, h, w = x.shape
    co = c // (r * r)
    x = x.reshape(n, co, r, r, h, w)
    x = jnp.transpose(x, (0, 1, 4, 2, 5, 3))
    return x.reshape(n, co, h * r, w * r)


def upsample_block_forward(x, params, upscale_factor=2):
    """x: (N, Cin, H, W) NCHW (float32 or bfloat16) -> (N, Cin//2//r^2, H*r, W*r)."""
    n, cin, height, width = x.shape
    io_dtype = x.dtype
    eps = 1e-5

    w = params["w"]                                   # (Cout, Cin), 1x1 conv weight
    cout = w.shape[0]
    scale = (params["gamma"] / jnp.sqrt(params["running_var"] + eps)).astype(jnp.float32)
    # conv bias folded into the BN shift:  (conv + b)*scale + (beta - mean*scale)
    shift = (params["beta"] - params["running_mean"] * scale
             + params["b"] * scale).astype(jnp.float32)
    w_io = w.astype(io_dtype)
    x_flat = x.reshape(n, cin, height * width)        # free view of NCHW

    # ---- fast path: bf16 I/O with PixelShuffle(2) fused into the store -------------
    low_first = _bf16_low_half_is_first()
    if (upscale_factor == 2 and io_dtype == jnp.bfloat16 and cout % 4 == 0
            and low_first is not None):
        th, bn = _plan_fused(n, cin, cout, height, width)
        if th is not None:
            n_co = cout // 4
            # original output channel 4*c + g (g = 2i+j)  ->  permuted row g*n_co + c
            perm = (jnp.arange(n_co)[None, :] * 4 + jnp.arange(4)[:, None]).reshape(-1)
            try:
                out_u32 = _conv1x1_bn_relu_shuffle(
                    x_flat, w_io[perm],
                    scale[perm].reshape(cout, 1), shift[perm].reshape(cout, 1),
                    height=height, width=width, th=th, bn=bn, low_first=low_first)
                out_u32 = jax.block_until_ready(out_u32)
            except Exception:
                # Mosaic rejected the fused store pattern -> correct unfused fallback.
                pass
            else:
                pairs = jax.lax.bitcast_convert_type(out_u32, jnp.bfloat16)
                return pairs.reshape(n, n_co, 2 * height, 2 * width)   # pure view

    # ---- general path: conv+BN+ReLU kernel, PixelShuffle as XLA reshape/transpose --
    hw = height * width
    tm, hw_pad, bn = _plan_flat(n, cin, cout, hw, io_dtype.itemsize, io_dtype.itemsize)
    if hw_pad != hw:                                   # pad instead of full-slab tiles
        x_flat = jnp.pad(x_flat, ((0, 0), (0, 0), (0, hw_pad - hw)))
    y = _conv1x1_bn_relu(x_flat, w_io, scale.reshape(cout, 1), shift.reshape(cout, 1),
                         tm=tm, bn=bn)
    if hw_pad != hw:
        y = y[:, :, :hw]
    y = y.reshape(n, cout, height, width)
    return pixel_shuffle_nchw(y, upscale_factor)


# ---------------------------------------------------------------------------
# demo / verification
# ---------------------------------------------------------------------------

def make_params(key, in_channels):
    cout = in_channels // 2
    k_w, k_b, k_g, k_be, k_m, k_v = jax.random.split(key, 6)
    w = jax.random.normal(k_w, (cout, in_channels), jnp.float32) * 0.1
    b = jax.random.normal(k_b, (cout,), jnp.float32) * 0.1
    gamma = 1.0 + 0.1 * jax.random.normal(k_g, (cout,), jnp.float32)
    beta = 0.1 * jax.random.normal(k_be, (cout,), jnp.float32)
    rmean = 0.1 * jax.random.normal(k_m, (cout,), jnp.float32)
    rvar = jnp.abs(1.0 + 0.1 * jax.random.normal(k_v, (cout,), jnp.float32))
    return {"w": w, "b": b, "gamma": gamma, "beta": beta,
            "running_mean": rmean, "running_var": rvar}


def reference_forward(x, params, upscale_factor=2):
    """Pure-JAX reference: conv1x1(+bias) -> BatchNorm(eval) -> ReLU -> PixelShuffle."""
    eps = 1e-5
    io_dtype = x.dtype
    w = params["w"].astype(io_dtype).astype(jnp.float32)
    xf = x.astype(jnp.float32)
    scale = params["gamma"] / jnp.sqrt(params["running_var"] + eps)
    shift = params["beta"] - params["running_mean"] * scale
    y = jnp.einsum("nchw,dc->ndhw", xf, w) + params["b"].reshape(1, -1, 1, 1)
    y = y * scale.reshape(1, -1, 1, 1) + shift.reshape(1, -1, 1, 1)
    y = jnp.maximum(y, 0.0).astype(io_dtype)
    return pixel_shuffle_nchw(y, upscale_factor)


if __name__ == "__main__":
    key = jax.random.PRNGKey(0)
    k_x, k_p = jax.random.split(key)

    # in_channels must be a multiple of 8 so Cout = Cin/2 is divisible by r^2 = 4.
    batch, cin, height, width = 2, 16, 16, 16
    params = make_params(k_p, cin)
    x32 = jax.random.normal(k_x, (batch, cin, height, width), jnp.float32)

    # float32 path (unfused store + XLA pixel shuffle).
    out32 = jax.block_until_ready(upsample_block_forward(x32, params))
    ref32 = reference_forward(x32, params)
    assert out32.shape == (batch, cin // 8, 2 * height, 2 * width), out32.shape
    assert jnp.allclose(out32, ref32, atol=5e-4, rtol=5e-4), \
        float(jnp.max(jnp.abs(out32 - ref32)))

    # bfloat16 inference path (fused PixelShuffle store when supported).
    x16 = x32.astype(jnp.bfloat16)
    out16 = jax.block_until_ready(upsample_block_forward(x16, params))
    ref16 = reference_forward(x16, params)
    assert out16.shape == ref16.shape and out16.dtype == jnp.bfloat16
    err = float(jnp.max(jnp.abs(out16.astype(jnp.float32) - ref16.astype(jnp.float32))))
    assert err <= 5e-2, err

    print("KERNEL_OK")
</pallas_src>

<mosaic_0001>
module attributes {stable_mosaic.version = 11 : i64} {
  func.func @_conv_bn_relu_kernel(%arg0: i32, %arg1: i32, %arg2: memref<1x16x256xf32, #tpu.memory_space<vmem>>, %arg3: memref<8x16xf32, #tpu.memory_space<vmem>>, %arg4: memref<8x1xf32, #tpu.memory_space<vmem>>, %arg5: memref<8x1xf32, #tpu.memory_space<vmem>>, %arg6: memref<1x8x256xf32, #tpu.memory_space<vmem>>) attributes {dimension_semantics = [#tpu.dimension_semantics<parallel>, #tpu.dimension_semantics<parallel>], iteration_bounds = array<i64: 2, 1>, scalar_prefetch = 0 : i64, scratch_operands = 0 : i64, tpu.core_type = #tpu.core_type<tc>, window_params = [{transform_indices = @transform_0, window_bounds = array<i64: 1, 16, 256>}, {pipeline_mode = #tpu.pipeline_mode<synchronous>, transform_indices = @transform_1, window_bounds = array<i64: 8, 16>}, {pipeline_mode = #tpu.pipeline_mode<synchronous>, transform_indices = @transform_2, window_bounds = array<i64: 8, 1>}, {pipeline_mode = #tpu.pipeline_mode<synchronous>, transform_indices = @transform_3, window_bounds = array<i64: 8, 1>}, {transform_indices = @transform_4, window_bounds = array<i64: 1, 8, 256>}]} {
    %c0 = arith.constant 0 : index
    %c0_0 = arith.constant 0 : index
    %0 = vector.load %arg3[%c0, %c0_0] : memref<8x16xf32, #tpu.memory_space<vmem>>, vector<8x16xf32>
    %c0_1 = arith.constant 0 : index
    %c0_2 = arith.constant 0 : index
    %c0_3 = arith.constant 0 : index
    %1 = vector.load %arg2[%c0_1, %c0_2, %c0_3] : memref<1x16x256xf32, #tpu.memory_space<vmem>>, vector<1x16x256xf32>
    %2 = vector.shape_cast %1 : vector<1x16x256xf32> to vector<16x256xf32>
    %cst = arith.constant dense<0.000000e+00> : vector<8x256xf32>
    %3 = tpu.matmul %0, %2, %cst {dimension_numbers = #tpu.dot_dimension_numbers<[1], [0], [0], [1], [0, 0, 1, 1], [], []>} : vector<8x16xf32>, vector<16x256xf32>, vector<8x256xf32> -> vector<8x256xf32>
    %c0_4 = arith.constant 0 : index
    %c0_5 = arith.constant 0 : index
    %4 = vector.load %arg4[%c0_4, %c0_5] : memref<8x1xf32, #tpu.memory_space<vmem>>, vector<8x1xf32>
    %5 = vector.broadcast %4 : vector<8x1xf32> to vector<8x256xf32>
    %6 = arith.mulf %3, %5 : vector<8x256xf32>
    %c0_6 = arith.constant 0 : index
    %c0_7 = arith.constant 0 : index
    %7 = vector.load %arg5[%c0_6, %c0_7] : memref<8x1xf32, #tpu.memory_space<vmem>>, vector<8x1xf32>
    %8 = vector.broadcast %7 : vector<8x1xf32> to vector<8x256xf32>
    %9 = arith.addf %6, %8 : vector<8x256xf32>
    %cst_8 = arith.constant 0.000000e+00 : f32
    %10 = vector.broadcast %cst_8 : f32 to vector<8x256xf32>
    %11 = arith.maximumf %9, %10 : vector<8x256xf32>
    %c0_9 = arith.constant 0 : index
    %c0_10 = arith.constant 0 : index
    %c0_11 = arith.constant 0 : index
    %12 = vector.load %arg6[%c0_9, %c0_10, %c0_11] : memref<1x8x256xf32, #tpu.memory_space<vmem>>, vector<1x8x256xf32>
    %13 = vector.shape_cast %12 : vector<1x8x256xf32> to vector<8x256xf32>
    %14 = vector.shape_cast %11 : vector<8x256xf32> to vector<1x8x256xf32>
    tpu.vector_store %arg6[%c0_9, %c0_10, %c0_11], %14 {strides = array<i32>} : memref<1x8x256xf32, #tpu.memory_space<vmem>>, vector<1x8x256xf32>,
    return
  }
  func.func @transform_0(%arg0: i32, %arg1: i32) -> (i32, i32, i32) {
    %c0_i32 = arith.constant 0 : i32
    %c0_i32_0 = arith.constant 0 : i32
    return %arg0, %c0_i32, %arg1 : i32, i32, i32
  }
  func.func @transform_1(%arg0: i32, %arg1: i32) -> (i32, i32) {
    %c0_i32 = arith.constant 0 : i32
    %c0_i32_0 = arith.constant 0 : i32
    %c0_i32_1 = arith.constant 0 : i32
    return %c0_i32, %c0_i32_0 : i32, i32
  }
  func.func @transform_2(%arg0: i32, %arg1: i32) -> (i32, i32) {
    %c0_i32 = arith.constant 0 : i32
    %c0_i32_0 = arith.constant 0 : i32
    %c0_i32_1 = arith.constant 0 : i32
    return %c0_i32, %c0_i32_0 : i32, i32
  }
  func.func @transform_3(%arg0: i32, %arg1: i32) -> (i32, i32) {
    %c0_i32 = arith.constant 0 : i32
    %c0_i32_0 = arith.constant 0 : i32
    %c0_i32_1 = arith.constant 0 : i32
    return %c0_i32, %c0_i32_0 : i32, i32
  }
  func.func @transform_4(%arg0: i32, %arg1: i32) -> (i32, i32, i32) {
    %c0_i32 = arith.constant 0 : i32
    %c0_i32_0 = arith.constant 0 : i32
    return %arg0, %c0_i32, %arg1 : i32, i32, i32
  }
}

</mosaic_0001>

<llo_original>
// kernel: tpu_custom_call.1
$region0: #{tpu_custom_call.1}
  #allocation0 [shape = 'u32[]', space=smem, size = 0x4, offset = 0x4, fixed_abs, tag = 'smem constant byte address 0x4 - core index']
  #allocation1 [shape = 'u32[72,128]{1,0:T(1,128)}', space=vmem, size = 0x9000, scoped, tag = 'internal scratch']
  %s0 = inlined_call_operand.hbm [shape: f32[2,16,256], index: 0, kind: input, shape index: {}]
  %s1 = inlined_call_operand.vmem [shape: f32[8,16], index: 1, kind: input, shape index: {}]
  %s2 = inlined_call_operand.vmem [shape: f32[8,1], index: 2, kind: input, shape index: {}]
  %s3 = inlined_call_operand.vmem [shape: f32[8,1], index: 3, kind: input, shape index: {}]
  %s4 = inlined_call_operand.hbm [shape: f32[2,8,256], index: 4, kind: output, shape index: {}]
  %s5 = sld [smem:[#allocation0]]
  $region53: #{tpu_custom_call.1} parent=0
    _
  %s7 = ssub.s32 1, %s5
  %s8 = scalar_select 0, %s7, %s5
  $region1: #{tpu_custom_call.1} parent=0
    #allocation2 [shape = 'u8[32768]{0}', space=vmem, size = 0x8000, scoped, tag = 'input window, operand 0']
    #allocation3 [shape = 's32[2]{0}', space=sflag, size = 0x8, scoped, tag = 'scoped memory for tpu_custom_call.1']
    #allocation4 [shape = 's32[2]{0}', space=sflag, size = 0x8, scoped, tag = 'scoped memory for tpu_custom_call.1']
    #allocation5 [shape = 'u8[16384]{0}', space=vmem, size = 0x4000, scoped, tag = 'output window, operand 0']
    %9 = vsyncpa [#allocation3], 0
    %s10 = scalar_lea.sflag [#allocation3], 1
    %11 = vsyncpa %s10, 0
    %12 = vsyncpa [#allocation4], 0
    %s13 = scalar_lea.sflag [#allocation4], 1
    %14 = vsyncpa %s13, 0
    loop: start=0, step=1, limit=4
    $region2: #{tpu_custom_call.1} parent=1 // loop_pre_header
      _
    $region3: #{tpu_custom_call.1} parent=1 // loop_header
      %s16 = sphi 0, %s20
      %p17 = scmp.ge.s32.totalorder %s16, 4
      %s23 = sphi 0, %s35
      %s24 = sphi 0, %s31
      %s25 = sphi 0, %s23
      %s26 = sphi 0, %s24
      %s27 = sphi 0, %s25
      %s28 = sphi 0, %s26
      %s40 = sphi 0, %s42
      %s43 = sphi 0, %s40
      %s44 = sphi 0, %s43
      %s60 = sphi 0, %s44
      %s64 = sphi 0, %s64
      %s66 = sphi 0, %s64
      %s67 = sphi 0, %s66
      %s81 = sphi 0, %s67
      %s85 = sphi 0, %s85
      %s87 = sphi 0, %s85
      %s88 = sphi 0, %s87
      %s102 = sphi 0, %s88
      %s106 = sphi 0, %s106
      %s108 = sphi 0, %s106
      %s109 = sphi 0, %s108
      %s123 = sphi 0, %s109
      %s131 = sphi 0, %s133
      %s134 = sphi 0, %s131
      %s135 = sphi 0, %s134
      %s151 = sphi 0, %s135
    $region4: #{tpu_custom_call.1} parent=1 // loop_header_branch
      %19 = sbr.rel (%p17) target = $region8
    $region5: #{tpu_custom_call.1} parent=1 // loop_body
      %s21 = ssub.s32 %s16, 1
      %s22 = ssub.s32 %s16, 2
      %s29 = sadd.s32 1, %s24
      %p30 = scmp.ge.s32.totalorder %s29, 1
      %s31 = scalar_select %p30, 0, %s29
      %s32 = sadd.s32 1, %s23
      %s33 = scalar_select %p30, %s32, %s23
      %p34 = scmp.ge.s32.totalorder %s33, 2
      %s35 = scalar_select %p34, 0, %s33
      %s36 = ssub.s32 %s23, %s35
      %s37 = ssub.s32 %s24, %s31
      %s38 = sor.u32 %s36, %s37
      %p39 = scmp.eq.s32.totalorder %s38, 0
      %s41 = sadd.s32 %s40, 1
      %s42 = scalar_select %p39, %s40, %s41
      %p45 = pneg %p39
      %p46 = scmp.eq.s32.totalorder %s16, 1
      %p47 = por %p45, %p46
      %p48 = scmp.ne.s32.totalorder %s40, %s43
      %p49 = scmp.eq.s32.totalorder %s16, 0
      %p50 = por %p48, %p49
      %p51 = scmp.ne.s32.totalorder %s40, %s43
      %p52 = scmp.eq.s32.totalorder %s21, 1
      %p53 = por %p51, %p52
      %p54 = scmp.ne.s32.totalorder %s43, %s44
      %p55 = scmp.eq.s32.totalorder %s21, 0
      %p56 = por %p54, %p55
      %p57 = scmp.ne.s32.totalorder %s43, %s44
      %p58 = scmp.eq.s32.totalorder %s22, 1
      %p59 = por %p57, %p58
      %p61 = scmp.ne.s32.totalorder %s44, %s60
      %p62 = scmp.eq.s32.totalorder %s22, 0
      %p63 = por %p61, %p62
      %s65 = sadd.s32 %s64, 1
      %p68 = scmp.eq.s32.totalorder %s16, 1
      %p69 = scmp.ne.s32.totalorder %s64, %s66
      %p70 = scmp.eq.s32.totalorder %s16, 0
      %p71 = por %p69, %p70
      %p72 = scmp.ne.s32.totalorder %s64, %s66
      %p73 = scmp.eq.s32.totalorder %s21, 1
      %p74 = por %p72, %p73
      %p75 = scmp.ne.s32.totalorder %s66, %s67
      %p76 = scmp.eq.s32.totalorder %s21, 0
      %p77 = por %p75, %p76
      %p78 = scmp.ne.s32.totalorder %s66, %s67
      %p79 = scmp.eq.s32.totalorder %s22, 1
      %p80 = por %p78, %p79
      %p82 = scmp.ne.s32.totalorder %s67, %s81
      %p83 = scmp.eq.s32.totalorder %s22, 0
      %p84 = por %p82, %p83
      %s86 = sadd.s32 %s85, 1
      %p89 = scmp.eq.s32.totalorder %s16, 1
      %p90 = scmp.ne.s32.totalorder %s85, %s87
      %p91 = scmp.eq.s32.totalorder %s16, 0
      %p92 = por %p90, %p91
      %p93 = scmp.ne.s32.totalorder %s85, %s87
      %p94 = scmp.eq.s32.totalorder %s21, 1
      %p95 = por %p93, %p94
      %p96 = scmp.ne.s32.totalorder %s87, %s88
      %p97 = scmp.eq.s32.totalorder %s21, 0
      %p98 = por %p96, %p97
      %p99 = scmp.ne.s32.totalorder %s87, %s88
      %p100 = scmp.eq.s32.totalorder %s22, 1
      %p101 = por %p99, %p100
      %p103 = scmp.ne.s32.totalorder %s88, %s102
      %p104 = scmp.eq.s32.totalorder %s22, 0
      %p105 = por %p103, %p104
      %s107 = sadd.s32 %s106, 1
      %p110 = scmp.eq.s32.totalorder %s16, 1
      %p111 = scmp.ne.s32.totalorder %s106, %s108
      %p112 = scmp.eq.s32.totalorder %s16, 0
      %p113 = por %p111, %p112
      %p114 = scmp.ne.s32.totalorder %s106, %s108
      %p115 = scmp.eq.s32.totalorder %s21, 1
      %p116 = por %p114, %p115
      %p117 = scmp.ne.s32.totalorder %s108, %s109
      %p118 = scmp.eq.s32.totalorder %s21, 0
      %p119 = por %p117, %p118
      %p120 = scmp.ne.s32.totalorder %s108, %s109
      %p121 = scmp.eq.s32.totalorder %s22, 1
      %p122 = por %p120, %p121
      %p124 = scmp.ne.s32.totalorder %s109, %s123
      %p125 = scmp.eq.s32.totalorder %s22, 0
      %p126 = por %p124, %p125
      %s127 = ssub.s32 %s23, %s35
      %s128 = ssub.s32 %s24, %s31
      %s129 = sor.u32 %s127, %s128
      %p130 = scmp.eq.s32.totalorder %s129, 0
      %s132 = sadd.s32 %s131, 1
      %s133 = scalar_select %p130, %s131, %s132
      %p136 = pneg %p130
      %p137 = scmp.eq.s32.totalorder %s16, 1
      %p138 = por %p136, %p137
      %p139 = scmp.ne.s32.totalorder %s131, %s134
      %p140 = scmp.eq.s32.totalorder %s16, 0
      %p141 = por %p139, %p140
      %p142 = scmp.ne.s32.totalorder %s131, %s134
      %p143 = scmp.eq.s32.totalorder %s21, 1
      %p144 = por %p142, %p143
      %p145 = scmp.ne.s32.totalorder %s134, %s135
      %p146 = scmp.eq.s32.totalorder %s21, 0
      %p147 = por %p145, %p146
      %p148 = scmp.ne.s32.totalorder %s134, %s135
      %p149 = scmp.eq.s32.totalorder %s22, 1
      %p150 = por %p148, %p149
      %p152 = scmp.ne.s32.totalorder %s135, %s151
      %p153 = scmp.eq.s32.totalorder %s22, 0
      %p154 = por %p152, %p153
      %p155 = scmp.le.s32.totalorder 1, %s16
      %p156 = scmp.lt.s32.totalorder %s16, 3
      %p157 = pnand %p155, %p156
      %p158 = pneg %p157
      // Predicated region
      $region9: #{tpu_custom_call.1} parent=5 // pred_check
        _
      $region10: #{tpu_custom_call.1} parent=5 // pred_check_branch
        %160 = sbr.rel (%p157) target = $region12
      $region11: #{tpu_custom_call.1} parent=5 // pred_region
        %s161 = ssub.s32 %s16, 1
        // Predicated region
        $region13: #{tpu_custom_call.1} parent=11 // pred_check
          %p162 = pneg %p77
        $region14: #{tpu_custom_call.1} parent=11 // pred_check_branch
          %164 = sbr.rel (%p162) target = $region16
        $region15: #{tpu_custom_call.1} parent=11 // pred_region
          _
        $region16: #{tpu_custom_call.1} parent=11 // pred_fallthru
          _
        // Predicated region
        $region17: #{tpu_custom_call.1} parent=11 // pred_check
          %p165 = pneg %p98
        $region18: #{tpu_custom_call.1} parent=11 // pred_check_branch
          %167 = sbr.rel (%p165) target = $region20
        $region19: #{tpu_custom_call.1} parent=11 // pred_region
          _
        $region20: #{tpu_custom_call.1} parent=11 // pred_fallthru
          _
        // Predicated region
        $region21: #{tpu_custom_call.1} parent=11 // pred_check
          %p168 = pneg %p119
        $region22: #{tpu_custom_call.1} parent=11 // pred_check_branch
          %170 = sbr.rel (%p168) target = $region24
        $region23: #{tpu_custom_call.1} parent=11 // pred_region
          _
        $region24: #{tpu_custom_call.1} parent=11 // pred_fallthru
          _
      $region12: #{tpu_custom_call.1} parent=5 // pred_fallthru
        _
      %p171 = scmp.lt.s32.totalorder %s16, 2
      // Predicated region
      $region25: #{tpu_custom_call.1} parent=5 // pred_check
        %p172 = pneg %p171
      $region26: #{tpu_custom_call.1} parent=5 // pred_check_branch
        %174 = sbr.rel (%p172) target = $region28
      $region27: #{tpu_custom_call.1} parent=5 // pred_region
        // Predicated region
        $region29: #{tpu_custom_call.1} parent=27 // pred_check
          %p175 = pneg %p50
        $region30: #{tpu_custom_call.1} parent=27 // pred_check_branch
          %177 = sbr.rel (%p175) target = $region32
        $region31: #{tpu_custom_call.1} parent=27 // pred_region
          %s178 = sand.u32 %s40, 1
          %s179 = scalar_lea.sflag [#allocation3], %s178
          %s180 = sand.u32 %s40, 1
          %s181 = smul.addr %s180, 32
          %s182 = scalar_lea.vmem [#allocation2], %s181
          %s183 = smul.u32 2, %s24
          %185 = vsyncadd %s179, 0
          %s186 = smul.addr %s23, 4
          %s187 = sadd.s32 %s183, %s186
          %s188 = smul.addr %s187, 8
          %s189 = scalar_lea.hbm %s0, %s188
          %s190 = sshll.u32 %s189, 4
          %s191 = int_to_ptr.hbm [resolvable:$true] %s190
          %s192 = sshll.u32 %s182, 4
          %s193 = int_to_ptr.vmem [resolvable:$true] %s192
          %198 = dma.hbm_to_vmem [thread:$0]  %s191, 512, %s193, %s179, 256, 256, 16
        $region32: #{tpu_custom_call.1} parent=27 // pred_fallthru
          _
      $region28: #{tpu_custom_call.1} parent=5 // pred_fallthru
        _
      %p199 = scmp.le.s32.totalorder 1, %s16
      %p200 = scmp.lt.s32.totalorder %s16, 3
      %p201 = pnand %p199, %p200
      %p202 = pneg %p201
      // Predicated region
      $region33: #{tpu_custom_call.1} parent=5 // pred_check
        _
      $region34: #{tpu_custom_call.1} parent=5 // pred_check_branch
        %204 = sbr.rel (%p201) target = $region36
      $region35: #{tpu_custom_call.1} parent=5 // pred_region
        %s205 = ssub.s32 %s16, 1
        %s206 = sand.u32 %s43, 1
        %s207 = scalar_lea.sflag [#allocation3], %s206
        %s208 = sand.u32 %s43, 1
        %s209 = smul.addr %s208, 32
        %s210 = scalar_lea.vmem [#allocation2], %s209
        // Predicated region
        $region37: #{tpu_custom_call.1} parent=35 // pred_check
          %p211 = pneg %p56
        $region38: #{tpu_custom_call.1} parent=35 // pred_check_branch
          %213 = sbr.rel (%p211) target = $region40
        $region39: #{tpu_custom_call.1} parent=35 // pred_region
          %215 = dma.done %s207, 512
        $region40: #{tpu_custom_call.1} parent=35 // pred_fallthru
          _
        %s216 = sand.u32 %s43, 1
        %s217 = scalar_lea.sflag [#allocation3], %s216
        %s218 = sand.u32 %s43, 1
        %s219 = smul.addr %s218, 32
        %s220 = scalar_lea.vmem [#allocation2], %s219
        %p221 = pneg %p56
        %p222 = pneg %p53
        %p223 = pneg %p77
        %p224 = pneg %p74
        %p225 = pneg %p98
        %p226 = pneg %p95
        %p227 = pneg %p119
        %p228 = pneg %p116
        %p229 = pneg %p147
        %p230 = pneg %p144
        %s231 = sand.u32 %s134, 1
        %s232 = scalar_lea.sflag [#allocation4], %s231
        %s233 = sand.u32 %s134, 1
        %s234 = smul.addr %s233, 16
        %s235 = scalar_lea.vmem [#allocation5], %s234
        %s236 = smul.u32 2, %s26
        %s237 = smul.u32 2, %s26
        %v238 = vld [vmem:[%s1] sm:$0xff]
        %v239 = vld [vmem:[%s210] sm:$0xff]
        %v240 = vld [vmem:[%s210 + $0x8] sm:$0xff]
        %v241 = vld [vmem:[%s210 + $0x10] sm:$0xff]
        %v242 = vld [vmem:[%s210 + $0x18] sm:$0xff]
        %vm243 = vcmask 130048
        %v245 = vsel %vm243, %v238, 0
        %247 = vmatpush.msra.mxu0 0.0
        %248 = vmatpush.msra.mxu0 0.0
        %249 = vmatpush.msra.mxu0 0.0
        %250 = vmatpush.msra.mxu0 0.0
        %251 = vmatpush.msra.mxu0 0.0
        %252 = vmatpush.msra.mxu0 0.0
        %253 = vmatpush.msra.mxu0 0.0
        %254 = vmatpush.msra.mxu0 0.0
        %255 = vmatpush.msra.mxu0 0.0
        %256 = vmatpush.msra.mxu0 0.0
        %257 = vmatpush.msra.mxu0 0.0
        %258 = vmatpush.msra.mxu0 0.0
        %259 = vmatpush.msra.mxu0 0.0
        %260 = vmatpush.msra.mxu0 0.0
        %261 = vmatpush.msra.mxu0 %v241
        %262 = vmatpush.msra.mxu0 %v239
        %263 = vmatmul.f32.gmra.mxu0 %v245
        %v264 = vpop.f32.mrf.mxu0
        %v265 = vadd.f32 0.0, %v264
        %266 = vdwg.mxu0
        %267 = vmatpush.msra.mxu0 0.0
        %268 = vmatpush.msra.mxu0 0.0
        %269 = vmatpush.msra.mxu0 0.0
        %270 = vmatpush.msra.mxu0 0.0
        %271 = vmatpush.msra.mxu0 0.0
        %272 = vmatpush.msra.mxu0 0.0
        %273 = vmatpush.msra.mxu0 0.0
        %274 = vmatpush.msra.mxu0 0.0
        %275 = vmatpush.msra.mxu0 0.0
        %276 = vmatpush.msra.mxu0 0.0
        %277 = vmatpush.msra.mxu0 0.0
        %278 = vmatpush.msra.mxu0 0.0
        %279 = vmatpush.msra.mxu0 0.0
        %280 = vmatpush.msra.mxu0 0.0
        %281 = vmatpush.msra.mxu0 %v242
        %282 = vmatpush.msra.mxu0 %v240
        %283 = vmatmul.f32.gmra.mxu0 %v245
        %v284 = vpop.f32.mrf.mxu0
        %v285 = vadd.f32 0.0, %v284
        %286 = vdwg.mxu0
        %v287 = vld [vmem:[%s2] sm:$0xff]
        %289 = vset.pattern.permute.xlu0 0
        %290 = vperm.xlu0 %289, %v287
        %v291 = vpop.permute.xlu0 %290
        %v293 = vmul.f32 %v265, %v291
        %v294 = vmul.f32 %v285, %v291
        %v295 = vld [vmem:[%s3] sm:$0xff]
        %297 = vset.pattern.permute.xlu0 0
        %298 = vperm.xlu0 %297, %v295
        %v299 = vpop.permute.xlu0 %298
        %v301 = vadd.f32 %v293, %v299
        %v302 = vadd.f32 %v294, %v299
        %v303 = vmax.f32 %v301, 0.0
        %v304 = vmax.f32 %v302, 0.0
        %305 = vst [vmem:[%s235] sm:$0xff] %v303
        %306 = vst [vmem:[%s235 + $0x8] sm:$0xff] %v304
        %s307 = sand.u32 %s134, 1
        %s308 = scalar_lea.sflag [#allocation4], %s307
        %s309 = sand.u32 %s134, 1
        %s310 = smul.addr %s309, 16
        %s311 = scalar_lea.vmem [#allocation5], %s310
        // Predicated region
        $region41: #{tpu_custom_call.1} parent=35 // pred_check
          %p312 = pneg %p144
        $region42: #{tpu_custom_call.1} parent=35 // pred_check_branch
          %314 = sbr.rel (%p312) target = $region44
        $region43: #{tpu_custom_call.1} parent=35 // pred_region
          %s315 = smul.u32 2, %s26
          %317 = vsyncadd %s308, 0
          %s318 = smul.addr %s25, 2
          %s319 = sadd.s32 %s315, %s318
          %s320 = smul.addr %s319, 8
          %s321 = scalar_lea.hbm %s4, %s320
          %s323 = sshll.u32 %s311, 4
          %s324 = int_to_ptr.vmem [resolvable:$true] %s323
          %s325 = sshll.u32 %s321, 4
          %s326 = int_to_ptr.hbm [resolvable:$true] %s325
          %328 = dma.vmem_to_hbm [thread:$0]  %s324, 256, %s326, %s308
        $region44: #{tpu_custom_call.1} parent=35 // pred_fallthru
          _
      $region36: #{tpu_custom_call.1} parent=5 // pred_fallthru
        _
      %p329 = scmp.le.s32.totalorder 2, %s16
      // Predicated region
      $region45: #{tpu_custom_call.1} parent=5 // pred_check
        %p330 = pneg %p329
      $region46: #{tpu_custom_call.1} parent=5 // pred_check_branch
        %332 = sbr.rel (%p330) target = $region48
      $region47: #{tpu_custom_call.1} parent=5 // pred_region
        %s333 = ssub.s32 %s16, 2
        // Predicated region
        $region49: #{tpu_custom_call.1} parent=47 // pred_check
          %p334 = pneg %p150
        $region50: #{tpu_custom_call.1} parent=47 // pred_check_branch
          %336 = sbr.rel (%p334) target = $region52
        $region51: #{tpu_custom_call.1} parent=47 // pred_region
          %s337 = sand.u32 %s135, 1
          %s338 = scalar_lea.sflag [#allocation4], %s337
          %s339 = sand.u32 %s135, 1
          %s340 = smul.addr %s339, 16
          %s341 = scalar_lea.vmem [#allocation5], %s340
          %343 = dma.done %s338, 256
        $region52: #{tpu_custom_call.1} parent=47 // pred_fallthru
          _
      $region48: #{tpu_custom_call.1} parent=5 // pred_fallthru
        _
    $region6: #{tpu_custom_call.1} parent=1 // loop_footer
      %s20 = sadd.s32 1, %s16
    $region7: #{tpu_custom_call.1} parent=1 // loop_footer_branch
      %15 = sbr.rel target = $region3
    $region8: #{tpu_custom_call.1} parent=1 // loop_exit
      _
    %344 = vsyncpa [#allocation3], 1
    %s345 = scalar_lea.sflag [#allocation3], 1
    %346 = vsyncpa %s345, 1
    %347 = vsyncpa [#allocation4], 1
    %s348 = scalar_lea.sflag [#allocation4], 1
    %349 = vsyncpa %s348, 1

</llo_original>
